<compile_context>
chip_gen: v5e
topology: v5e:2x2
jax: 0.10.0
libtpu: 0.0.40
codegen_flags: <defaults>
</compile_context>

<pallas_src>
import jax
import jax.numpy as jnp
from jax.experimental import pallas as pl
from jax.experimental.pallas import tpu as pltpu


_MiB = 1024 * 1024


# --------------------------------------------------------------------------- #
# Generation-aware VMEM budgets.
# --------------------------------------------------------------------------- #
def _vmem_budgets(user_target=None):
    """(working-set target, hard cap, physical VMEM) per TensorCore."""
    try:
        physical = int(pltpu.get_tpu_info().vmem_capacity_bytes)
    except Exception:
        physical = 64 * _MiB                    # conservative default (v7x)
    if physical >= 100 * _MiB:                  # v5e / v6e: 128 MiB per TC
        target, hard_cap = 96 * _MiB, 112 * _MiB
    else:                                       # v7x: 64 MiB per TC
        target, hard_cap = 40 * _MiB, 56 * _MiB
    if user_target is not None:
        target = min(int(user_target), hard_cap)
    return target, hard_cap, physical


def _vmem_limit(need, physical):
    return int(min(max(need + 8 * _MiB, 32 * _MiB), physical - 2 * _MiB))


# --------------------------------------------------------------------------- #
# Fused single-pass kernel: pool + MLP + sigmoid gate + rescale, one HBM pass.
# --------------------------------------------------------------------------- #
def _make_fused_kernel(channels_last):
    red = 1 if channels_last else 2     # HW axis of the (B, ..., ...) block

    def kernel(x_ref, w1t_ref, w2t_ref, o_ref):
        # x_ref : (B, HW, C) if channels_last else (B, C, HW)
        # w1t   : (C, hidden)   -- Conv2d(C, hidden, 1) weight, pre-transposed
        # w2t   : (hidden, C)   -- Conv2d(hidden, C, 1) weight, pre-transposed
        x = x_ref[...]
        b = x.shape[0]
        hw = x.shape[red]

        # Pooling in f32 (single slab read feeds both reductions).  The slab
        # itself is never upcast: the rescale below multiplies in x.dtype.
        s = jnp.sum(x, axis=red, dtype=jnp.float32)          # (B, C)
        mx = jnp.max(x, axis=red).astype(jnp.float32)        # (B, C)
        pooled = jnp.concatenate([s * (1.0 / hw), mx], axis=0)   # (2B, C)

        # Shared MLP batched over {avg, max} x B (tiny MXU work).
        h = jnp.dot(pooled, w1t_ref[...], preferred_element_type=jnp.float32)
        h = jnp.maximum(h, 0.0)                              # (2B, hidden)
        y = jnp.dot(h, w2t_ref[...], preferred_element_type=jnp.float32)

        gate = jax.nn.sigmoid(y[:b] + y[b:]).astype(x.dtype)     # (B, C)
        if channels_last:
            o_ref[...] = (x * gate[:, None, :]).astype(o_ref.dtype)
        else:
            o_ref[...] = (x * gate[:, :, None]).astype(o_ref.dtype)

    return kernel


def _channel_attention_fused(x3, w1, w2, b_tile, vmem_limit, channels_last):
    n = x3.shape[0]
    hidden, c = w1.shape
    hw = x3.shape[1] if channels_last else x3.shape[2]
    itemsize = x3.dtype.itemsize

    w1t = jnp.transpose(w1)              # (C, hidden) -- plain-JAX glue, tiny
    w2t = jnp.transpose(w2)              # (hidden, C)
    w_bytes = (w1.size + w2.size) * 4

    xblk = (b_tile, hw, c) if channels_last else (b_tile, c, hw)
    grid = ((n + b_tile - 1) // b_tile,)     # cdiv: OOB batch tail is discarded

    cost = pl.CostEstimate(
        flops=3 * n * c * hw + 8 * n * c * hidden,
        transcendentals=n * c,
        bytes_accessed=2 * n * c * hw * itemsize + 2 * w_bytes)

    return pl.pallas_call(
        _make_fused_kernel(channels_last),
        out_shape=jax.ShapeDtypeStruct(x3.shape, x3.dtype),
        grid_spec=pltpu.PrefetchScalarGridSpec(
            num_scalar_prefetch=0,
            grid=grid,
            in_specs=[
                pl.BlockSpec(xblk, lambda i: (i, 0, 0)),
                pl.BlockSpec((c, hidden), lambda i: (0, 0)),
                pl.BlockSpec((hidden, c), lambda i: (0, 0)),
            ],
            out_specs=pl.BlockSpec(xblk, lambda i: (i, 0, 0)),
        ),
        compiler_params=pltpu.CompilerParams(
            dimension_semantics=("parallel",),
            vmem_limit_bytes=vmem_limit),
        cost_estimate=cost,
    )(x3, w1t, w2t)


# --------------------------------------------------------------------------- #
# Split path: ONE merged kernel, grid=(N, 2 passes, HW tiles).
#   pass 0: stream x, accumulate sum/max, compute gate into VMEM scratch.
#   pass 1: stream x again, write x * gate tile by tile.
# The output index map (.., j*p) keeps HBM writebacks confined to pass 1.
# --------------------------------------------------------------------------- #
def _make_split_kernel(hw_total, t_hw, channels_last):
    ragged = (hw_total % t_hw) != 0
    red = 0 if channels_last else 1          # HW axis of the 2-D tile
    inv_hw = 1.0 / float(hw_total)

    def kernel(x_ref, wa_ref, wb_ref, o_ref, sum_sc, max_sc, gate_sc):
        p = pl.program_id(1)                 # 0 = pooling pass, 1 = rescale
        j = pl.program_id(2)                 # HW tile index
        last = pl.num_programs(2) - 1

        x = x_ref[0]                         # (t_hw, C) or (C, t_hw)

        @pl.when(jnp.logical_and(p == 0, j == 0))
        def _init():
            sum_sc[...] = jnp.zeros_like(sum_sc)
            max_sc[...] = jnp.full_like(max_sc, -jnp.inf)

        def _accumulate(masked):
            if masked:
                pos = jax.lax.broadcasted_iota(jnp.int32, x.shape, red)
                valid = (j * t_hw + pos) < hw_total
                xs = jnp.where(valid, x, jnp.zeros_like(x))
                xm = jnp.where(valid, x, jnp.full_like(x, -jnp.inf))
            else:
                xs, xm = x, x
            sum_sc[...] += jnp.sum(xs, axis=red, keepdims=True,
                                   dtype=jnp.float32)
            max_sc[...] = jnp.maximum(
                max_sc[...],
                jnp.max(xm, axis=red, keepdims=True).astype(jnp.float32))

        # Tail mask hoisted out of the steady state: only the last tile of a
        # ragged HW extent pays for the iota + where.
        if not ragged:
            @pl.when(p == 0)
            def _():
                _accumulate(False)
        else:
            @pl.when(jnp.logical_and(p == 0, j < last))
            def _():
                _accumulate(False)

            @pl.when(jnp.logical_and(p == 0, j == last))
            def _():
                _accumulate(True)

        @pl.when(jnp.logical_and(p == 0, j == last))
        def _finalize():
            avg = sum_sc[...] * inv_hw
            if channels_last:
                # wa = w1.T (C, hidden), wb = w2.T (hidden, C); gate (1, C)
                pooled = jnp.concatenate([avg, max_sc[...]], axis=0)    # (2, C)
                h = jnp.dot(pooled, wa_ref[...],
                            preferred_element_type=jnp.float32)
                h = jnp.maximum(h, 0.0)
                y = jnp.dot(h, wb_ref[...],
                            preferred_element_type=jnp.float32)         # (2, C)
                gate_sc[...] = jax.nn.sigmoid(y[0:1] + y[1:2])
            else:
                # wa = w1 (hidden, C), wb = w2 (C, hidden); gate (C, 1)
                pooled = jnp.concatenate([avg, max_sc[...]], axis=1)    # (C, 2)
                h = jnp.dot(wa_ref[...], pooled,
                            preferred_element_type=jnp.float32)
                h = jnp.maximum(h, 0.0)
                y = jnp.dot(wb_ref[...], h,
                            preferred_element_type=jnp.float32)         # (C, 2)
                gate_sc[...] = jax.nn.sigmoid(y[:, 0:1] + y[:, 1:2])

        @pl.when(p == 1)
        def _rescale():
            # Multiply in x.dtype (gate cast once) -- no slab-sized f32 temp.
            o_ref[0] = (x * gate_sc[...].astype(x.dtype)).astype(o_ref.dtype)

    return kernel


def _channel_attention_split(x3, w1, w2, target, physical, channels_last,
                             hw_tile=None):
    n = x3.shape[0]
    hidden, c = w1.shape
    hw = x3.shape[1] if channels_last else x3.shape[2]
    itemsize = x3.dtype.itemsize
    w_bytes = (w1.size + w2.size) * 4

    if hw_tile is None:
        # Per HW-column cost: 2x in + 2x out buffers + ~1 block of temporaries
        # (+ f32 upcast during pooling for sub-32-bit inputs).
        per_col = 5 * c * itemsize + (c * 4 if itemsize < 4 else 0)
        budget = max(target - 2 * w_bytes - 2 * _MiB, 128 * per_col)
        t_hw = (budget // per_col) // 128 * 128
        # Roofline saturates by ~512-1024-lane tiles; larger only burns VMEM
        # headroom (scarce under v7x's 64 MiB/TC).
        t_hw = max(128, min(t_hw, 2048))
    else:
        assert hw_tile % 128 == 0, "split_hw_tile must be a multiple of 128"
        t_hw = hw_tile
    if t_hw >= hw:
        t_hw = hw                            # full extent is always legal
    n_hw = (hw + t_hw - 1) // t_hw

    block = c * t_hw * itemsize
    need = (5 * block + (c * t_hw * 4 if itemsize < 4 else 0)
            + 2 * w_bytes + 3 * c * 4 + 2 * _MiB)
    vmem_limit = _vmem_limit(need, physical)

    if channels_last:
        wa, wb = jnp.transpose(w1), jnp.transpose(w2)   # (C, hidden), (hidden, C)
        x_spec = pl.BlockSpec((1, t_hw, c), lambda i, p, j: (i, j, 0))
        o_spec = pl.BlockSpec((1, t_hw, c), lambda i, p, j: (i, j * p, 0))
        wa_spec = pl.BlockSpec((c, hidden), lambda i, p, j: (0, 0))
        wb_spec = pl.BlockSpec((hidden, c), lambda i, p, j: (0, 0))
        vec = (1, c)                                    # lane-dense gate scratch
    else:
        wa, wb = w1, w2                                 # (hidden, C), (C, hidden)
        x_spec = pl.BlockSpec((1, c, t_hw), lambda i, p, j: (i, 0, j))
        o_spec = pl.BlockSpec((1, c, t_hw), lambda i, p, j: (i, 0, j * p))
        wa_spec = pl.BlockSpec((hidden, c), lambda i, p, j: (0, 0))
        wb_spec = pl.BlockSpec((c, hidden), lambda i, p, j: (0, 0))
        vec = (c, 1)

    cost = pl.CostEstimate(
        flops=3 * n * c * hw + 8 * n * c * hidden,
        transcendentals=n * c,
        bytes_accessed=3 * n * c * hw * itemsize + 2 * w_bytes)

    return pl.pallas_call(
        _make_split_kernel(hw, t_hw, channels_last),
        out_shape=jax.ShapeDtypeStruct(x3.shape, x3.dtype),
        grid_spec=pltpu.PrefetchScalarGridSpec(
            num_scalar_prefetch=0,
            grid=(n, 2, n_hw),
            in_specs=[x_spec, wa_spec, wb_spec],
            out_specs=o_spec,
            scratch_shapes=[pltpu.VMEM(vec, jnp.float32),   # running sum
                            pltpu.VMEM(vec, jnp.float32),   # running max
                            pltpu.VMEM(vec, jnp.float32)],  # sigmoid gate
        ),
        compiler_params=pltpu.CompilerParams(
            dimension_semantics=("parallel", "arbitrary", "arbitrary"),
            vmem_limit_bytes=vmem_limit),
        cost_estimate=cost,
    )(x3, wa, wb)


# --------------------------------------------------------------------------- #
# Public wrapper
# --------------------------------------------------------------------------- #
def channel_attention(x, w1, w2, *, channels_last=False, vmem_target_bytes=None,
                      force_split=False, split_hw_tile=None):
    """CBAM channel attention forward.

    x  : (N, C, H, W) if channels_last=False (matches the PyTorch module), or
         (N, H, W, C) if channels_last=True  (lane-dense fast path -- use only
         if the caller already keeps activations in NHWC; never transpose just
         to reach it).
    w1 : (hidden, C)  -- Conv2d(C, hidden, 1, bias=False) weight (squeezed)
    w2 : (C, hidden)  -- Conv2d(hidden, C, 1, bias=False) weight (squeezed)

    bf16 x halves HBM traffic (largest win on v5e); pooling/MLP stay in f32.
    """
    if channels_last:
        n, h, w, c = x.shape
        x3 = x.reshape(n, h * w, c)
    else:
        n, c, h, w = x.shape
        x3 = x.reshape(n, c, h * w)
    hw = h * w

    hidden, c_w = w1.shape
    assert c_w == c and w2.shape == (c, hidden), "weight shapes mismatch channels"

    itemsize = x.dtype.itemsize
    w_bytes = (w1.size + w2.size) * 4
    target, _hard_cap, physical = _vmem_budgets(vmem_target_bytes)

    # Honest fused-path working-set model per batch element:
    #   2x in + 2x out (double-buffered) + ~1 block of temporaries
    #   (+ 1 f32 block for the pooling upcast when x is sub-32-bit).
    per_batch = c * hw * itemsize
    per_batch_cost = 5 * per_batch + (c * hw * 4 if itemsize < 4 else 0)
    fixed = 2 * w_bytes + 2 * _MiB

    use_fused = (not force_split) and (per_batch_cost + fixed) <= target

    if use_fused:
        bt_budget = max(1, int((target - fixed) // per_batch_cost))
        # Force >= 2 (ideally >= 4) grid steps so v7x's two TensorCores both
        # get work on the "parallel" axis and the in/out DMAs overlap with the
        # next tile's compute.  No divisor-of-N requirement (cdiv grid; the
        # out-of-bounds batch tail is discarded on writeback).
        min_steps = 4 if n >= 4 else (2 if n >= 2 else 1)
        if min_steps > 1:
            b_tile = max(1, min(bt_budget, n // min_steps))
        else:
            b_tile = max(1, min(bt_budget, n))
        vmem_limit = _vmem_limit(b_tile * per_batch_cost + fixed, physical)
        out3 = _channel_attention_fused(x3, w1, w2, b_tile, vmem_limit,
                                        channels_last)
    else:
        out3 = _channel_attention_split(x3, w1, w2, target, physical,
                                        channels_last, hw_tile=split_hw_tile)

    return out3.reshape(x.shape)


# --------------------------------------------------------------------------- #
# Pure-JAX reference mirroring the PyTorch forward (NCHW).
# --------------------------------------------------------------------------- #
def _reference(x, w1, w2):
    avg = jnp.mean(x, axis=(2, 3))                       # (N, C)
    mxv = jnp.max(x, axis=(2, 3))                        # (N, C)

    def mlp(v):
        return jnp.maximum(v @ w1.T, 0.0) @ w2.T         # (N, C)

    gate = jax.nn.sigmoid(mlp(avg) + mlp(mxv))[:, :, None, None]
    return x * gate


if __name__ == "__main__":
    key = jax.random.PRNGKey(0)
    keys = jax.random.split(key, 7)

    # --- case 1: small NCHW, fused single-pass path (>= 2 grid steps) --------
    N, C, H, W = 2, 4, 16, 16
    hidden = max(C // 16, 4)                             # -> 4
    x = jax.random.normal(keys[0], (N, C, H, W), dtype=jnp.float32)
    w1 = jax.random.normal(keys[1], (hidden, C), dtype=jnp.float32) * 0.1
    w2 = jax.random.normal(keys[2], (C, hidden), dtype=jnp.float32) * 0.1

    out = jax.block_until_ready(channel_attention(x, w1, w2))
    ref = _reference(x, w1, w2)
    assert out.shape == (N, C, H, W)
    assert jnp.allclose(out, ref, atol=1e-5, rtol=1e-5), "fused NCHW mismatch"

    # --- case 2: fused path with N not a multiple of the batch tile
    #             (exercises the discarded OOB batch tail of the cdiv grid). --
    N3 = 9
    x3 = jax.random.normal(keys[3], (N3, C, 8, 8), dtype=jnp.float32)
    out3 = jax.block_until_ready(channel_attention(x3, w1, w2))
    ref3 = _reference(x3, w1, w2)
    assert jnp.allclose(out3, ref3, atol=1e-5, rtol=1e-5), "ragged-batch mismatch"

    # --- case 3: forced split path (merged pool+rescale kernel) on NCHW with
    #             a non-128-multiple HW so the masked tail tile is covered. ---
    N2, C2, H2, W2 = 2, 8, 20, 20                        # HW = 400
    hidden2 = max(C2 // 16, 4)                           # -> 4
    x2 = jax.random.normal(keys[4], (N2, C2, H2, W2), dtype=jnp.float32)
    w1b = jax.random.normal(keys[5], (hidden2, C2), dtype=jnp.float32) * 0.1
    w2b = jax.random.normal(keys[6], (C2, hidden2), dtype=jnp.float32) * 0.1

    out2 = jax.block_until_ready(
        channel_attention(x2, w1b, w2b, force_split=True, split_hw_tile=256))
    ref2 = _reference(x2, w1b, w2b)
    assert jnp.allclose(out2, ref2, atol=1e-5, rtol=1e-5), "split NCHW mismatch"

    # --- case 4: channels-last (NHWC) lane-dense path, fused + forced split.
    #             (transpose here is only the test harness choosing NHWC.) ----
    x_nhwc = jnp.transpose(x, (0, 2, 3, 1))
    out_nhwc = jax.block_until_ready(
        channel_attention(x_nhwc, w1, w2, channels_last=True))
    assert jnp.allclose(out_nhwc, jnp.transpose(ref, (0, 2, 3, 1)),
                        atol=1e-5, rtol=1e-5), "fused NHWC mismatch"

    x2_nhwc = jnp.transpose(x2, (0, 2, 3, 1))
    out2_nhwc = jax.block_until_ready(
        channel_attention(x2_nhwc, w1b, w2b, channels_last=True,
                          force_split=True, split_hw_tile=256))
    assert jnp.allclose(out2_nhwc, jnp.transpose(ref2, (0, 2, 3, 1)),
                        atol=1e-5, rtol=1e-5), "split NHWC mismatch"

    print("KERNEL_OK")
</pallas_src>

<mosaic_0001>
module attributes {stable_mosaic.version = 11 : i64} {
  func.func @kernel(%arg0: i32, %arg1: memref<1x4x256xf32, #tpu.memory_space<vmem>>, %arg2: memref<4x4xf32, #tpu.memory_space<vmem>>, %arg3: memref<4x4xf32, #tpu.memory_space<vmem>>, %arg4: memref<1x4x256xf32, #tpu.memory_space<vmem>>) attributes {dimension_semantics = [#tpu.dimension_semantics<parallel>], iteration_bounds = array<i64: 2>, scalar_prefetch = 0 : i64, scratch_operands = 0 : i64, tpu.core_type = #tpu.core_type<tc>, window_params = [{transform_indices = @transform_0, window_bounds = array<i64: 1, 4, 256>}, {pipeline_mode = #tpu.pipeline_mode<synchronous>, transform_indices = @transform_1, window_bounds = array<i64: 4, 4>}, {pipeline_mode = #tpu.pipeline_mode<synchronous>, transform_indices = @transform_2, window_bounds = array<i64: 4, 4>}, {transform_indices = @transform_3, window_bounds = array<i64: 1, 4, 256>}]} {
    %c0 = arith.constant 0 : index
    %c0_0 = arith.constant 0 : index
    %c0_1 = arith.constant 0 : index
    %0 = vector.load %arg1[%c0, %c0_0, %c0_1] : memref<1x4x256xf32, #tpu.memory_space<vmem>>, vector<1x4x256xf32>
    %cst = arith.constant dense<0.000000e+00> : vector<1x4xf32>
    %1 = vector.multi_reduction <add>, %0, %cst [2] : vector<1x4x256xf32> to vector<1x4xf32>
    %cst_2 = arith.constant dense<0xFF800000> : vector<1x4xf32>
    %2 = vector.multi_reduction <maximumf>, %0, %cst_2 [2] : vector<1x4x256xf32> to vector<1x4xf32>
    %cst_3 = arith.constant 3.906250e-03 : f32
    %3 = vector.broadcast %cst_3 : f32 to vector<1x4xf32>
    %4 = arith.mulf %1, %3 : vector<1x4xf32>
    %5 = tpu.concatenate %4, %2 in 0 : vector<1x4xf32>, vector<1x4xf32> -> vector<2x4xf32>
    %c0_4 = arith.constant 0 : index
    %c0_5 = arith.constant 0 : index
    %6 = vector.load %arg2[%c0_4, %c0_5] : memref<4x4xf32, #tpu.memory_space<vmem>>, vector<4x4xf32>
    %cst_6 = arith.constant dense<0.000000e+00> : vector<2x4xf32>
    %7 = tpu.matmul %5, %6, %cst_6 {dimension_numbers = #tpu.dot_dimension_numbers<[1], [0], [0], [1], [0, 0, 1, 1], [], []>} : vector<2x4xf32>, vector<4x4xf32>, vector<2x4xf32> -> vector<2x4xf32>
    %cst_7 = arith.constant 0.000000e+00 : f32
    %8 = vector.broadcast %cst_7 : f32 to vector<2x4xf32>
    %9 = arith.maximumf %7, %8 : vector<2x4xf32>
    %c0_8 = arith.constant 0 : index
    %c0_9 = arith.constant 0 : index
    %10 = vector.load %arg3[%c0_8, %c0_9] : memref<4x4xf32, #tpu.memory_space<vmem>>, vector<4x4xf32>
    %cst_10 = arith.constant dense<0.000000e+00> : vector<2x4xf32>
    %11 = tpu.matmul %9, %10, %cst_10 {dimension_numbers = #tpu.dot_dimension_numbers<[1], [0], [0], [1], [0, 0, 1, 1], [], []>} : vector<2x4xf32>, vector<4x4xf32>, vector<2x4xf32> -> vector<2x4xf32>
    %12 = vector.extract_strided_slice %11 {offsets = [0, 0], sizes = [1, 4], strides = [1, 1]} : vector<2x4xf32> to vector<1x4xf32>
    %13 = vector.extract_strided_slice %11 {offsets = [1, 0], sizes = [1, 4], strides = [1, 1]} : vector<2x4xf32> to vector<1x4xf32>
    %14 = arith.addf %12, %13 : vector<1x4xf32>
    %15 = arith.negf %14 : vector<1x4xf32>
    %16 = math.exp %15 : vector<1x4xf32>
    %cst_11 = arith.constant 1.000000e+00 : f32
    %17 = vector.broadcast %cst_11 : f32 to vector<1x4xf32>
    %18 = arith.addf %17, %16 : vector<1x4xf32>
    %19 = arith.divf %17, %18 : vector<1x4xf32>
    %20 = vector.shape_cast %19 : vector<1x4xf32> to vector<1x4x1xf32>
    %21 = vector.broadcast %20 : vector<1x4x1xf32> to vector<1x4x256xf32>
    %22 = arith.mulf %0, %21 : vector<1x4x256xf32>
    %c0_12 = arith.constant 0 : index
    %c0_13 = arith.constant 0 : index
    %c0_14 = arith.constant 0 : index
    %23 = vector.load %arg4[%c0_12, %c0_13, %c0_14] : memref<1x4x256xf32, #tpu.memory_space<vmem>>, vector<1x4x256xf32>
    tpu.vector_store %arg4[%c0_12, %c0_13, %c0_14], %22 {strides = array<i32>} : memref<1x4x256xf32, #tpu.memory_space<vmem>>, vector<1x4x256xf32>,
    return
  }
  func.func @transform_0(%arg0: i32) -> (i32, i32, i32) {
    %c0_i32 = arith.constant 0 : i32
    %c0_i32_0 = arith.constant 0 : i32
    %c0_i32_1 = arith.constant 0 : i32
    return %arg0, %c0_i32, %c0_i32_0 : i32, i32, i32
  }
  func.func @transform_1(%arg0: i32) -> (i32, i32) {
    %c0_i32 = arith.constant 0 : i32
    %c0_i32_0 = arith.constant 0 : i32
    %c0_i32_1 = arith.constant 0 : i32
    return %c0_i32, %c0_i32_0 : i32, i32
  }
  func.func @transform_2(%arg0: i32) -> (i32, i32) {
    %c0_i32 = arith.constant 0 : i32
    %c0_i32_0 = arith.constant 0 : i32
    %c0_i32_1 = arith.constant 0 : i32
    return %c0_i32, %c0_i32_0 : i32, i32
  }
  func.func @transform_3(%arg0: i32) -> (i32, i32, i32) {
    %c0_i32 = arith.constant 0 : i32
    %c0_i32_0 = arith.constant 0 : i32
    %c0_i32_1 = arith.constant 0 : i32
    return %arg0, %c0_i32, %c0_i32_0 : i32, i32, i32
  }
}

</mosaic_0001>

<llo_original>
// kernel: tpu_custom_call.1
$region0: #{tpu_custom_call.1}
  #allocation0 [shape = 'u32[]', space=smem, size = 0x4, offset = 0x4, fixed_abs, tag = 'smem constant byte address 0x4 - core index']
  #allocation1 [shape = 'u32[72,128]{1,0:T(1,128)}', space=vmem, size = 0x9000, scoped, tag = 'internal scratch']
  %s0 = inlined_call_operand.hbm [shape: f32[2,4,256], index: 0, kind: input, shape index: {}]
  %s1 = inlined_call_operand.hbm [shape: f32[4,4], index: 1, kind: input, shape index: {}]
  %s2 = inlined_call_operand.hbm [shape: f32[4,4], index: 2, kind: input, shape index: {}]
  %s3 = inlined_call_operand.hbm [shape: f32[2,4,256], index: 3, kind: output, shape index: {}]
  %s4 = sld [smem:[#allocation0]]
  $region57: #{tpu_custom_call.1} parent=0
    _
  %s6 = ssub.s32 1, %s4
  %s7 = scalar_select 0, %s6, %s4
  $region1: #{tpu_custom_call.1} parent=0
    #allocation2 [shape = 'u8[8192]{0}', space=vmem, size = 0x2000, scoped, tag = 'input window, operand 0']
    #allocation3 [shape = 's32[2]{0}', space=sflag, size = 0x8, scoped, tag = 'scoped memory for tpu_custom_call.1']
    #allocation4 [shape = 's32[2]{0}', space=sflag, size = 0x8, scoped, tag = 'scoped memory for tpu_custom_call.1']
    #allocation5 [shape = 'u8[2048]{0}', space=vmem, size = 0x800, scoped, tag = 'input window, operand 1, single buffered']
    #allocation6 [shape = 's32[1]{0}', space=sflag, size = 0x4, scoped, tag = 'scoped memory for tpu_custom_call.1']
    #allocation7 [shape = 'u8[2048]{0}', space=vmem, size = 0x800, scoped, tag = 'input window, operand 2, single buffered']
    #allocation8 [shape = 'u8[8192]{0}', space=vmem, size = 0x2000, scoped, tag = 'output window, operand 0']
    %8 = vsyncpa [#allocation3], 0
    %s9 = scalar_lea.sflag [#allocation3], 1
    %10 = vsyncpa %s9, 0
    %11 = vsyncpa [#allocation6], 0
    %12 = vsyncpa [#allocation4], 0
    %s13 = scalar_lea.sflag [#allocation4], 1
    %14 = vsyncpa %s13, 0
    loop: start=0, step=1, limit=4
    $region2: #{tpu_custom_call.1} parent=1 // loop_pre_header
      _
    $region3: #{tpu_custom_call.1} parent=1 // loop_header
      %s16 = sphi 0, %s20
      %p17 = scmp.ge.s32.totalorder %s16, 4
      %s26 = sphi 0, %s28
      %s29 = sphi 0, %s26
      %s30 = sphi 0, %s29
      %s46 = sphi 0, %s30
      %s50 = sphi 0, %s50
      %s52 = sphi 0, %s50
      %s53 = sphi 0, %s52
      %s67 = sphi 0, %s53
      %s71 = sphi 0, %s71
      %s73 = sphi 0, %s71
      %s74 = sphi 0, %s73
      %s88 = sphi 0, %s74
      %s94 = sphi 0, %s96
      %s97 = sphi 0, %s94
      %s98 = sphi 0, %s97
      %s114 = sphi 0, %s98
    $region4: #{tpu_custom_call.1} parent=1 // loop_header_branch
      %19 = sbr.rel (%p17) target = $region8
    $region5: #{tpu_custom_call.1} parent=1 // loop_body
      %s21 = ssub.s32 %s16, 1
      %s22 = ssub.s32 %s16, 2
      %s23 = sadd.s32 %s16, 1
      %s24 = ssub.s32 %s16, %s23
      %p25 = scmp.eq.s32.totalorder %s24, 0
      %s27 = sadd.s32 %s26, 1
      %s28 = scalar_select %p25, %s26, %s27
      %p31 = pneg %p25
      %p32 = scmp.eq.s32.totalorder %s16, 1
      %p33 = por %p31, %p32
      %p34 = scmp.ne.s32.totalorder %s26, %s29
      %p35 = scmp.eq.s32.totalorder %s16, 0
      %p36 = por %p34, %p35
      %p37 = scmp.ne.s32.totalorder %s26, %s29
      %p38 = scmp.eq.s32.totalorder %s21, 1
      %p39 = por %p37, %p38
      %p40 = scmp.ne.s32.totalorder %s29, %s30
      %p41 = scmp.eq.s32.totalorder %s21, 0
      %p42 = por %p40, %p41
      %p43 = scmp.ne.s32.totalorder %s29, %s30
      %p44 = scmp.eq.s32.totalorder %s22, 1
      %p45 = por %p43, %p44
      %p47 = scmp.ne.s32.totalorder %s30, %s46
      %p48 = scmp.eq.s32.totalorder %s22, 0
      %p49 = por %p47, %p48
      %s51 = sadd.s32 %s50, 1
      %p54 = scmp.eq.s32.totalorder %s16, 1
      %p55 = scmp.ne.s32.totalorder %s50, %s52
      %p56 = scmp.eq.s32.totalorder %s16, 0
      %p57 = por %p55, %p56
      %p58 = scmp.ne.s32.totalorder %s50, %s52
      %p59 = scmp.eq.s32.totalorder %s21, 1
      %p60 = por %p58, %p59
      %p61 = scmp.ne.s32.totalorder %s52, %s53
      %p62 = scmp.eq.s32.totalorder %s21, 0
      %p63 = por %p61, %p62
      %p64 = scmp.ne.s32.totalorder %s52, %s53
      %p65 = scmp.eq.s32.totalorder %s22, 1
      %p66 = por %p64, %p65
      %p68 = scmp.ne.s32.totalorder %s53, %s67
      %p69 = scmp.eq.s32.totalorder %s22, 0
      %p70 = por %p68, %p69
      %s72 = sadd.s32 %s71, 1
      %p75 = scmp.eq.s32.totalorder %s16, 1
      %p76 = scmp.ne.s32.totalorder %s71, %s73
      %p77 = scmp.eq.s32.totalorder %s16, 0
      %p78 = por %p76, %p77
      %p79 = scmp.ne.s32.totalorder %s71, %s73
      %p80 = scmp.eq.s32.totalorder %s21, 1
      %p81 = por %p79, %p80
      %p82 = scmp.ne.s32.totalorder %s73, %s74
      %p83 = scmp.eq.s32.totalorder %s21, 0
      %p84 = por %p82, %p83
      %p85 = scmp.ne.s32.totalorder %s73, %s74
      %p86 = scmp.eq.s32.totalorder %s22, 1
      %p87 = por %p85, %p86
      %p89 = scmp.ne.s32.totalorder %s74, %s88
      %p90 = scmp.eq.s32.totalorder %s22, 0
      %p91 = por %p89, %p90
      %s92 = ssub.s32 %s16, %s23
      %p93 = scmp.eq.s32.totalorder %s92, 0
      %s95 = sadd.s32 %s94, 1
      %s96 = scalar_select %p93, %s94, %s95
      %p99 = pneg %p93
      %p100 = scmp.eq.s32.totalorder %s16, 1
      %p101 = por %p99, %p100
      %p102 = scmp.ne.s32.totalorder %s94, %s97
      %p103 = scmp.eq.s32.totalorder %s16, 0
      %p104 = por %p102, %p103
      %p105 = scmp.ne.s32.totalorder %s94, %s97
      %p106 = scmp.eq.s32.totalorder %s21, 1
      %p107 = por %p105, %p106
      %p108 = scmp.ne.s32.totalorder %s97, %s98
      %p109 = scmp.eq.s32.totalorder %s21, 0
      %p110 = por %p108, %p109
      %p111 = scmp.ne.s32.totalorder %s97, %s98
      %p112 = scmp.eq.s32.totalorder %s22, 1
      %p113 = por %p111, %p112
      %p115 = scmp.ne.s32.totalorder %s98, %s114
      %p116 = scmp.eq.s32.totalorder %s22, 0
      %p117 = por %p115, %p116
      %p118 = scmp.le.s32.totalorder 1, %s16
      %p119 = scmp.lt.s32.totalorder %s16, 3
      %p120 = pnand %p118, %p119
      %p121 = pneg %p120
      // Predicated region
      $region9: #{tpu_custom_call.1} parent=5 // pred_check
        _
      $region10: #{tpu_custom_call.1} parent=5 // pred_check_branch
        %123 = sbr.rel (%p120) target = $region12
      $region11: #{tpu_custom_call.1} parent=5 // pred_region
        %s124 = ssub.s32 %s16, 1
        // Predicated region
        $region13: #{tpu_custom_call.1} parent=11 // pred_check
          %p125 = pneg %p63
        $region14: #{tpu_custom_call.1} parent=11 // pred_check_branch
          %127 = sbr.rel (%p125) target = $region16
        $region15: #{tpu_custom_call.1} parent=11 // pred_region
          %129 = vsyncadd [#allocation6], 0
          %s131 = sshll.u32 %s1, 4
          %s132 = int_to_ptr.hbm [resolvable:$true] %s131
          %s133 = sshll.u32 [#allocation5], 4
          %s134 = int_to_ptr.vmem [resolvable:$true] %s133
          %136 = dma.hbm_to_vmem [thread:$0]  %s132, 64, %s134, [#allocation6]
        $region16: #{tpu_custom_call.1} parent=11 // pred_fallthru
          _
        // Predicated region
        $region17: #{tpu_custom_call.1} parent=11 // pred_check
          %p137 = pneg %p84
        $region18: #{tpu_custom_call.1} parent=11 // pred_check_branch
          %139 = sbr.rel (%p137) target = $region20
        $region19: #{tpu_custom_call.1} parent=11 // pred_region
          %141 = vsyncadd [#allocation6], 0
          %s143 = sshll.u32 %s2, 4
          %s144 = int_to_ptr.hbm [resolvable:$true] %s143
          %s145 = sshll.u32 [#allocation7], 4
          %s146 = int_to_ptr.vmem [resolvable:$true] %s145
          %148 = dma.hbm_to_vmem [thread:$0]  %s144, 64, %s146, [#allocation6]
        $region20: #{tpu_custom_call.1} parent=11 // pred_fallthru
          _
      $region12: #{tpu_custom_call.1} parent=5 // pred_fallthru
        _
      %p149 = scmp.lt.s32.totalorder %s16, 2
      // Predicated region
      $region21: #{tpu_custom_call.1} parent=5 // pred_check
        %p150 = pneg %p149
      $region22: #{tpu_custom_call.1} parent=5 // pred_check_branch
        %152 = sbr.rel (%p150) target = $region24
      $region23: #{tpu_custom_call.1} parent=5 // pred_region
        // Predicated region
        $region25: #{tpu_custom_call.1} parent=23 // pred_check
          %p153 = pneg %p36
        $region26: #{tpu_custom_call.1} parent=23 // pred_check_branch
          %155 = sbr.rel (%p153) target = $region28
        $region27: #{tpu_custom_call.1} parent=23 // pred_region
          %s156 = sand.u32 %s26, 1
          %s157 = scalar_lea.sflag [#allocation3], %s156
          %s158 = sand.u32 %s26, 1
          %s159 = smul.addr %s158, 8
          %s160 = scalar_lea.vmem [#allocation2], %s159
          %162 = vsyncadd %s157, 0
          %s163 = smul.addr %s16, 2
          %s164 = smul.addr %s163, 4
          %s165 = scalar_lea.hbm %s0, %s164
          %s167 = sshll.u32 %s165, 4
          %s168 = int_to_ptr.hbm [resolvable:$true] %s167
          %s169 = sshll.u32 %s160, 4
          %s170 = int_to_ptr.vmem [resolvable:$true] %s169
          %172 = dma.hbm_to_vmem [thread:$0]  %s168, 128, %s170, %s157
        $region28: #{tpu_custom_call.1} parent=23 // pred_fallthru
          _
      $region24: #{tpu_custom_call.1} parent=5 // pred_fallthru
        _
      %p173 = scmp.le.s32.totalorder 1, %s16
      %p174 = scmp.lt.s32.totalorder %s16, 3
      %p175 = pnand %p173, %p174
      %p176 = pneg %p175
      // Predicated region
      $region29: #{tpu_custom_call.1} parent=5 // pred_check
        _
      $region30: #{tpu_custom_call.1} parent=5 // pred_check_branch
        %178 = sbr.rel (%p175) target = $region32
      $region31: #{tpu_custom_call.1} parent=5 // pred_region
        %s179 = ssub.s32 %s16, 1
        %s180 = sand.u32 %s29, 1
        %s181 = scalar_lea.sflag [#allocation3], %s180
        %s182 = sand.u32 %s29, 1
        %s183 = smul.addr %s182, 8
        %s184 = scalar_lea.vmem [#allocation2], %s183
        // Predicated region
        $region33: #{tpu_custom_call.1} parent=31 // pred_check
          %p185 = pneg %p42
        $region34: #{tpu_custom_call.1} parent=31 // pred_check_branch
          %187 = sbr.rel (%p185) target = $region36
        $region35: #{tpu_custom_call.1} parent=31 // pred_region
          %189 = dma.done %s181, 128
        $region36: #{tpu_custom_call.1} parent=31 // pred_fallthru
          _
        // Predicated region
        $region37: #{tpu_custom_call.1} parent=31 // pred_check
          %p190 = pneg %p63
        $region38: #{tpu_custom_call.1} parent=31 // pred_check_branch
          %192 = sbr.rel (%p190) target = $region40
        $region39: #{tpu_custom_call.1} parent=31 // pred_region
          %194 = dma.done [#allocation6], 64
        $region40: #{tpu_custom_call.1} parent=31 // pred_fallthru
          _
        // Predicated region
        $region41: #{tpu_custom_call.1} parent=31 // pred_check
          %p195 = pneg %p84
        $region42: #{tpu_custom_call.1} parent=31 // pred_check_branch
          %197 = sbr.rel (%p195) target = $region44
        $region43: #{tpu_custom_call.1} parent=31 // pred_region
          %199 = dma.done [#allocation6], 64
        $region44: #{tpu_custom_call.1} parent=31 // pred_fallthru
          _
        %s200 = sand.u32 %s29, 1
        %s201 = scalar_lea.sflag [#allocation3], %s200
        %s202 = sand.u32 %s29, 1
        %s203 = smul.addr %s202, 8
        %s204 = scalar_lea.vmem [#allocation2], %s203
        %p205 = pneg %p42
        %p206 = pneg %p39
        %p207 = pneg %p63
        %p208 = pneg %p60
        %p209 = pneg %p84
        %p210 = pneg %p81
        %p211 = pneg %p110
        %p212 = pneg %p107
        %s213 = sand.u32 %s97, 1
        %s214 = scalar_lea.sflag [#allocation4], %s213
        %s215 = sand.u32 %s97, 1
        %s216 = smul.addr %s215, 8
        %s217 = scalar_lea.vmem [#allocation8], %s216
        %v218 = vld [vmem:[%s184] sm:$0xff]
        %220 = vst [vmem:[#allocation1] ss:$2 sm:$0xff] %v218
        %v221 = vld.sshfl [vmem:[#allocation1] sm:$0xff pattern:$0x75316420]
        %v222 = vld.sshfl [vmem:[#allocation1 + $0x8] sm:$0xff pattern:$0x75316420]
        %vm225 = vcmask 1043456
        %v226 = vsel %vm225, %v221, 0.0
        %v227 = vsel %vm225, %v222, 0.0
        %v228 = vadd.f32 %v226, %v227
        %229 = vadd.xlane.f32.xlu0 %v228
        %v230 = vpop.xlane.xlu0 %229
        %231 = vst [vmem:[#allocation1] ss:$2 sm:$0xff] %v218
        %v232 = vld.sshfl [vmem:[#allocation1] sm:$0xff pattern:$0x75316420]
        %v233 = vld.sshfl [vmem:[#allocation1 + $0x8] sm:$0xff pattern:$0x75316420]
        %v236 = vsel %vm225, %v232, -inf
        %v237 = vsel %vm225, %v233, -inf
        %v238 = vmax.f32 %v236, %v237
        %239 = vmax.xlane.f32.xlu0 %v238
        %v240 = vpop.xlane.xlu0 %239
        %v241 = vmul.f32 %v230, 0.00390625
        %v243 = vlaneseq
        %v244 = vand.u32 %v243, 127
        %v245 = vperm.slane %v241, %v244
        %v248 = vperm.slane %v240, %v244
        %vm250 = vcmask 1040384
        %v251 = vsel %vm250, %v245, %v248
        %v252 = vld [vmem:[#allocation5] sm:$0xf]
        %vm253 = vcmask 31744
        %v255 = vsel %vm253, %v251, 0
        %v258 = vsel %vm225, %v252, 0
        %260 = vmatpush.msra.mxu0 0.0
        %261 = vmatpush.msra.mxu0 0.0
        %262 = vmatpush.msra.mxu0 0.0
        %263 = vmatpush.msra.mxu0 0.0
        %264 = vmatpush.msra.mxu0 0.0
        %265 = vmatpush.msra.mxu0 0.0
        %266 = vmatpush.msra.mxu0 0.0
        %267 = vmatpush.msra.mxu0 0.0
        %268 = vmatpush.msra.mxu0 0.0
        %269 = vmatpush.msra.mxu0 0.0
        %270 = vmatpush.msra.mxu0 0.0
        %271 = vmatpush.msra.mxu0 0.0
        %272 = vmatpush.msra.mxu0 0.0
        %273 = vmatpush.msra.mxu0 0.0
        %274 = vmatpush.msra.mxu0 0.0
        %275 = vmatpush.msra.mxu0 %v258
        %276 = vmatmul.f32.gmra.mxu0 %v255
        %v277 = vpop.f32.mrf.mxu0
        %v278 = vadd.f32 0.0, %v277
        %279 = vdwg.mxu0
        %v280 = vmax.f32 %v278, 0.0
        %v281 = vld [vmem:[#allocation7] sm:$0xf]
        %v283 = vsel %vm253, %v280, 0
        %v286 = vsel %vm225, %v281, 0
        %288 = vmatpush.msra.mxu0 0.0
        %289 = vmatpush.msra.mxu0 0.0
        %290 = vmatpush.msra.mxu0 0.0
        %291 = vmatpush.msra.mxu0 0.0
        %292 = vmatpush.msra.mxu0 0.0
        %293 = vmatpush.msra.mxu0 0.0
        %294 = vmatpush.msra.mxu0 0.0
        %295 = vmatpush.msra.mxu0 0.0
        %296 = vmatpush.msra.mxu0 0.0
        %297 = vmatpush.msra.mxu0 0.0
        %298 = vmatpush.msra.mxu0 0.0
        %299 = vmatpush.msra.mxu0 0.0
        %300 = vmatpush.msra.mxu0 0.0
        %301 = vmatpush.msra.mxu0 0.0
        %302 = vmatpush.msra.mxu0 0.0
        %303 = vmatpush.msra.mxu0 %v286
        %304 = vmatmul.f32.gmra.mxu0 %v283
        %v305 = vpop.f32.mrf.mxu0
        %v306 = vadd.f32 0.0, %v305
        %307 = vdwg.mxu0
        %v309 = vrot.slane %v306, 1
        %v311 = vadd.f32 %v306, %v309
        %v312 = vxor.u32 %v311, 2147483648
        %v313 = vmul.f32 %v312, 1.442695
        %v314 = vpow.pop %v313
        %v315 = vadd.f32 %v314, 1.0
        %v316 = vrcp.pop %v315
        %v317 = vmul.f32 %v315, %v316
        %v318 = vsub.f32 1.0, %v317
        %v319 = vmul.f32 %v316, %v318
        %v320 = vadd.f32 %v316, %v319
        %vm321 = vweird.f32 %v315
        %vm322 = vweird.f32 %v316
        %vm323 = vmor %vm321, %vm322
        %v324 = vsel %vm323, %v316, %v320
        %v325 = vand.u32 2147483647, %v315
        %vm326 = vcmp.eq.f32.partialorder %v325, 8.507059e+37
        %v327 = vand.u32 %v315, 2147483648
        %v328 = vor.u32 1.1754944e-38, %v327
        %v329 = vsel %vm326, %v328, %v324
        %v330 = vmul.f32 1.0, %v329
        %v331 = vperm.slane %v330, 0
        %v332 = vlaneseq
        %v333 = vshrl.u32 %v332, 7
        %335 = vset.pattern.permute.xlu0 %v333
        %336 = vperm.xlu0 %335, %v331
        %v337 = vpop.permute.xlu0 %336
        %v340 = vunpack.c.l.s4 839922192
        %v341 = vunpack.c.0.s8 %v340
        %v342 = vperm.slane %v337, %v341
        %v344 = vmul.f32 %v218, %v342
        %345 = vst [vmem:[%s217] sm:$0xff] %v344
        %s346 = sand.u32 %s97, 1
        %s347 = scalar_lea.sflag [#allocation4], %s346
        %s348 = sand.u32 %s97, 1
        %s349 = smul.addr %s348, 8
        %s350 = scalar_lea.vmem [#allocation8], %s349
        // Predicated region
        $region45: #{tpu_custom_call.1} parent=31 // pred_check
          %p351 = pneg %p107
        $region46: #{tpu_custom_call.1} parent=31 // pred_check_branch
          %353 = sbr.rel (%p351) target = $region48
        $region47: #{tpu_custom_call.1} parent=31 // pred_region
          %355 = vsyncadd %s347, 0
          %s356 = smul.addr %s21, 2
          %s357 = smul.addr %s356, 4
          %s358 = scalar_lea.hbm %s3, %s357
          %s360 = sshll.u32 %s350, 4
          %s361 = int_to_ptr.vmem [resolvable:$true] %s360
          %s362 = sshll.u32 %s358, 4
          %s363 = int_to_ptr.hbm [resolvable:$true] %s362
          %365 = dma.vmem_to_hbm [thread:$0]  %s361, 128, %s363, %s347
        $region48: #{tpu_custom_call.1} parent=31 // pred_fallthru
          _
      $region32: #{tpu_custom_call.1} parent=5 // pred_fallthru
        _
      %p366 = scmp.le.s32.totalorder 2, %s16
      // Predicated region
      $region49: #{tpu_custom_call.1} parent=5 // pred_check
        %p367 = pneg %p366
      $region50: #{tpu_custom_call.1} parent=5 // pred_check_branch
        %369 = sbr.rel (%p367) target = $region52
      $region51: #{tpu_custom_call.1} parent=5 // pred_region
        %s370 = ssub.s32 %s16, 2
        // Predicated region
        $region53: #{tpu_custom_call.1} parent=51 // pred_check
          %p371 = pneg %p113
        $region54: #{tpu_custom_call.1} parent=51 // pred_check_branch
          %373 = sbr.rel (%p371) target = $region56
        $region55: #{tpu_custom_call.1} parent=51 // pred_region
          %s374 = sand.u32 %s98, 1
          %s375 = scalar_lea.sflag [#allocation4], %s374
          %s376 = sand.u32 %s98, 1
          %s377 = smul.addr %s376, 8
          %s378 = scalar_lea.vmem [#allocation8], %s377
          %380 = dma.done %s375, 128
        $region56: #{tpu_custom_call.1} parent=51 // pred_fallthru
          _
      $region52: #{tpu_custom_call.1} parent=5 // pred_fallthru
        _
    $region6: #{tpu_custom_call.1} parent=1 // loop_footer
      %s20 = sadd.s32 1, %s16
    $region7: #{tpu_custom_call.1} parent=1 // loop_footer_branch
      %15 = sbr.rel target = $region3
    $region8: #{tpu_custom_call.1} parent=1 // loop_exit
      _
    %381 = vsyncpa [#allocation3], 1
    %s382 = scalar_lea.sflag [#allocation3], 1
    %383 = vsyncpa %s382, 1
    %384 = vsyncpa [#allocation6], 1
    %385 = vsyncpa [#allocation4], 1
    %s386 = scalar_lea.sflag [#allocation4], 1
    %387 = vsyncpa %s386, 1

</llo_original>
